<compile_context>
chip_gen: v7x
topology: tpu7x:2x2x1
jax: 0.10.0
libtpu: 0.0.40
codegen_flags: <defaults>
</compile_context>

<pallas_src>
import functools

import jax
import jax.numpy as jnp
from jax.experimental import pallas as pl
from jax.experimental.pallas import tpu as pltpu


# ----------------------- tiled projection matmul (MXU) ---------------------- #

def _matmul_kernel(x_ref, w_ref, o_ref, acc_ref):
    @pl.when(pl.program_id(2) == 0)
    def _():
        acc_ref[...] = jnp.zeros_like(acc_ref)

    acc_ref[...] += jnp.dot(
        x_ref[...], w_ref[...], preferred_element_type=jnp.float32
    )

    @pl.when(pl.program_id(2) == pl.num_programs(2) - 1)
    def _():
        o_ref[...] = acc_ref[...].astype(o_ref.dtype)


def _round_up(v, m):
    return (v + m - 1) // m * m


def _fit_tile(dim, target, align):
    """Pick a tile <= target: full dim if it fits, else the largest multiple of
    `align` <= target that divides dim; otherwise `align` (callers zero-pad)."""
    if dim <= target:
        return dim
    t = target
    while dim % t != 0 and t > align:
        t -= align
    return t


def pallas_matmul(x, w, *, tm=256, tn=256, tk=512, out_dtype=None):
    """Tiled matmul with a VMEM f32 accumulator (K is the reduction axis).

    Non-divisible shapes are zero-padded up to the tile grid and the result is
    sliced back (no giant single-tile fallback).  Defaults target the 256-class
    MXUs on v6e/v7x; drop tm/tn to 128 on v5e if tuning per generation.
    """
    M, K = x.shape
    K2, N = w.shape
    assert K == K2
    out_dtype = out_dtype or x.dtype

    tm = _fit_tile(M, tm, 8)
    tk = _fit_tile(K, tk, 128)
    tn = _fit_tile(N, tn, 128)
    Mp, Kp, Np = _round_up(M, tm), _round_up(K, tk), _round_up(N, tn)
    if (Mp, Kp) != (M, K):
        x = jnp.pad(x, ((0, Mp - M), (0, Kp - K)))
    if (Kp, Np) != (K, N):
        w = jnp.pad(w, ((0, Kp - K), (0, Np - N)))

    out = pl.pallas_call(
        _matmul_kernel,
        out_shape=jax.ShapeDtypeStruct((Mp, Np), out_dtype),
        grid=(Mp // tm, Np // tn, Kp // tk),
        in_specs=[
            pl.BlockSpec((tm, tk), lambda i, j, k: (i, k)),
            pl.BlockSpec((tk, tn), lambda i, j, k: (k, j)),
        ],
        out_specs=pl.BlockSpec((tm, tn), lambda i, j, k: (i, j)),
        scratch_shapes=[pltpu.VMEM((tm, tn), jnp.float32)],
        compiler_params=pltpu.CompilerParams(
            dimension_semantics=("parallel", "parallel", "arbitrary")
        ),
    )(x, w)
    if (Mp, Np) != (M, N):
        out = out[:M, :N]
    return out


# -------------------- local attention + fused output proj ------------------- #

def _local_attn_kernel(q_ref, kc_ref, kl_ref, kr_ref, vc_ref, vl_ref, vr_ref,
                       wo_ref, o_ref, khalo_ref, vhalo_ref, *,
                       heads, dim_head, window, chunk_windows, n_win):
    cw = chunk_windows
    la = 3 * window

    # Assemble the chunk's contiguous K/V halo (chunk + one window each side)
    # into VMEM scratch once; per-window neighbourhoods are slices of it.
    khalo_ref[:window, :] = kl_ref[...]
    khalo_ref[window:(cw + 1) * window, :] = kc_ref[...]
    khalo_ref[(cw + 1) * window:, :] = kr_ref[...]
    vhalo_ref[:window, :] = vl_ref[...]
    vhalo_ref[window:(cw + 1) * window, :] = vc_ref[...]
    vhalo_ref[(cw + 1) * window:, :] = vr_ref[...]

    # Band mask is window-independent: k_pos - q_pos == j - window - i.
    # Build one (window, la) mask and share it across all windows of the chunk.
    i_idx = jax.lax.broadcasted_iota(jnp.int32, (window, la), 0)
    j_idx = jax.lax.broadcasted_iota(jnp.int32, (window, la), 1)
    rel = j_idx - window - i_idx
    band_bad = (rel < -window) | (rel > window)   # exact_windowsize, lb = lf = 1

    neg = jnp.asarray(-1e30, jnp.float32)         # large finite; exp underflows to 0
    chunk_w0 = pl.program_id(1) * cw              # global index of chunk's first window
    out_dim = wo_ref.shape[1]

    for w in range(cw):                           # static unroll: cw is small & static
        g = chunk_w0 + w                          # global window index
        # Out-of-range key positions only exist for the global first/last window
        # (whose halo blocks were clamped); everything else is the band mask.
        left_bad = (g == 0) & (j_idx < window)
        right_bad = (g == n_win - 1) & (j_idx >= 2 * window)
        bad = band_bad | left_bad | right_bad

        q_w = q_ref[w * window:(w + 1) * window, :]        # (window, inner)
        k_w = khalo_ref[w * window:(w + 3) * window, :]    # (la, inner)
        v_w = vhalo_ref[w * window:(w + 3) * window, :]

        out_w = jnp.zeros((window, out_dim), jnp.float32)
        # TODO(synk): per-head lane slices (dim_head < 128 lanes) remain; a fully
        # head-batched dot_general would need a head-major HBM layout.
        for h in range(heads):                    # static unroll; heads is small
            sl = slice(h * dim_head, (h + 1) * dim_head)
            sim = jax.lax.dot_general(
                q_w[:, sl], k_w[:, sl], (((1,), (1,)), ((), ())),
                preferred_element_type=jnp.float32)        # (window, la)
            sim = jnp.where(bad, neg, sim)
            sim_max = jnp.max(sim, axis=-1, keepdims=True)
            p = jnp.exp(sim - sim_max)
            denom = jnp.sum(p, axis=-1, keepdims=True)
            # Own window is always unmasked, so denom > 0 (no NaN guard needed).
            attn = p * pl.reciprocal(denom, approx=True)   # EUP, not a VALU divide
            o_h = jnp.dot(attn.astype(v_w.dtype), v_w[:, sl],
                          preferred_element_type=jnp.float32)     # (window, dim_head)
            # Fused to_out: o_h @ w_out[head rows] straight on the MXU; no lane
            # concatenate and no (B, N, inner) HBM round trip.
            out_w = out_w + jnp.dot(o_h.astype(wo_ref.dtype), wo_ref[sl, :],
                                    preferred_element_type=jnp.float32)
        o_ref[w * window:(w + 1) * window, :] = out_w.astype(o_ref.dtype)


def _pick_chunk_windows(n_win, window, target_rows=512):
    """Largest divisor of n_win whose chunk (cw*window rows) stays <= target_rows,
    keeping per-step VMEM bounded (sized with v7x's smaller 64 MiB VMEM in mind)."""
    cw = 1
    for cand in range(1, n_win + 1):
        if n_win % cand == 0 and cand * window <= target_rows:
            cw = cand
    return cw


def pallas_local_attention(qkv, w_out, *, heads, dim_head, window_size,
                           chunk_windows=None):
    """qkv: (B, N, 3*heads*dim_head), w_out: (inner, dim) -> (B, N, dim).

    Local windowed attention (look_backward = look_forward = 1, exact window,
    non-causal) with the output projection fused in.
    """
    B, N, three_inner = qkv.shape
    inner = heads * dim_head
    assert three_inner == 3 * inner
    assert N % window_size == 0, "demo keeps N a multiple of window_size"
    # TODO(synk): autopad for ragged N (module uses autopad=True) not implemented.
    assert window_size % 8 == 0, "window_size must be sublane aligned (multiple of 8)"

    n_win = N // window_size
    if chunk_windows is None:
        chunk_windows = _pick_chunk_windows(n_win, window_size)
    assert n_win % chunk_windows == 0
    cw = chunk_windows
    crows = cw * window_size
    n_chunks = n_win // cw
    dim = w_out.shape[1]
    w_out = w_out.astype(qkv.dtype)

    kernel = functools.partial(
        _local_attn_kernel, heads=heads, dim_head=dim_head, window=window_size,
        chunk_windows=cw, n_win=n_win)

    # Left/right halos are one-window blocks of the same qkv array with clamped
    # window-block indices; edge chunks read a clamped window that the kernel masks.
    def left(c):
        return jnp.maximum(c * cw - 1, 0)

    def right(c):
        return jnp.minimum((c + 1) * cw, n_win - 1)

    in_specs = [
        pl.BlockSpec((None, crows, inner), lambda b, c: (b, c, 0)),              # Q chunk
        pl.BlockSpec((None, crows, inner), lambda b, c: (b, c, 1)),              # K chunk
        pl.BlockSpec((None, window_size, inner), lambda b, c: (b, left(c), 1)),  # K left halo
        pl.BlockSpec((None, window_size, inner), lambda b, c: (b, right(c), 1)), # K right halo
        pl.BlockSpec((None, crows, inner), lambda b, c: (b, c, 2)),              # V chunk
        pl.BlockSpec((None, window_size, inner), lambda b, c: (b, left(c), 2)),  # V left halo
        pl.BlockSpec((None, window_size, inner), lambda b, c: (b, right(c), 2)), # V right halo
        pl.BlockSpec((inner, dim), lambda b, c: (0, 0)),                         # w_out (resident)
    ]
    out_spec = pl.BlockSpec((None, crows, dim), lambda b, c: (b, c, 0))

    return pl.pallas_call(
        kernel,
        out_shape=jax.ShapeDtypeStruct((B, N, dim), qkv.dtype),
        grid=(B, n_chunks),
        in_specs=in_specs,
        out_specs=out_spec,
        scratch_shapes=[
            pltpu.VMEM(((cw + 2) * window_size, inner), qkv.dtype),  # K halo
            pltpu.VMEM(((cw + 2) * window_size, inner), qkv.dtype),  # V halo
        ],
        compiler_params=pltpu.CompilerParams(
            dimension_semantics=("parallel", "parallel")),
    )(qkv, qkv, qkv, qkv, qkv, qkv, qkv, w_out)


# ------------------------------- forward ----------------------------------- #

def fold_q_scale(w_qkv, heads):
    """One-time weight prep: fold q * dim_head**-0.5 into w_qkv's Q columns."""
    inner = w_qkv.shape[1] // 3
    dim_head = inner // heads
    return w_qkv.at[:, :inner].multiply(dim_head ** -0.5)


def local_mha_forward(x, w_qkv_folded, w_out, *, heads, window_size,
                      chunk_windows=None, compute_dtype=None):
    """LocalMHA forward (module defaults: non-causal, no prenorm/qk_rmsnorm/xpos).

    `w_qkv_folded` must already contain the q scale (see fold_q_scale).
    `compute_dtype=jnp.bfloat16` casts projection operands for the bf16-native
    MXUs on v6e/v7x (f32 accumulation kept); the demo keeps f32 for tight
    parity with the f32 reference.
    """
    B, N, D = x.shape
    inner = w_qkv_folded.shape[1] // 3
    dim_head = inner // heads

    xm, wq = x.reshape(B * N, D), w_qkv_folded
    if compute_dtype is not None:
        xm, wq = xm.astype(compute_dtype), wq.astype(compute_dtype)
    # to_qkv (no bias): fused (B, N, 3*inner), stays in 'b n (h d)' layout.
    qkv = pallas_matmul(xm, wq, out_dtype=x.dtype).reshape(B, N, 3 * inner)

    # Local attention with to_out fused (no (B, N, inner) HBM round trip).
    return pallas_local_attention(
        qkv, w_out, heads=heads, dim_head=dim_head,
        window_size=window_size, chunk_windows=chunk_windows)


# ----------------------- pure-JAX reference (checking) --------------------- #

def _look_around(t, pad_value):
    BH, W, window, d = t.shape
    pad = jnp.full((BH, 1, window, d), pad_value, t.dtype)
    tp = jnp.concatenate([pad, t, pad], axis=1)
    return jnp.concatenate([tp[:, i:i + W] for i in range(3)], axis=2)


def _build_window_mask(N, window_size):
    W = N // window_size
    pos = jnp.arange(N, dtype=jnp.int32).reshape(W, window_size)
    pad = jnp.full((1, window_size), -1, jnp.int32)
    pos_padded = jnp.concatenate([pad, pos, pad], axis=0)
    bq_k = jnp.concatenate([pos_padded[i:i + W] for i in range(3)], axis=1)
    bq_t = pos[:, :, None]
    bq_kj = bq_k[:, None, :]
    pad_mask = bq_kj == -1
    max_backward = window_size
    max_forward = window_size
    return ((bq_kj - max_forward) > bq_t) | (bq_t > (bq_kj + max_backward)) | pad_mask


def ref_forward(x, w_qkv, w_out, *, heads, window_size):
    B, N, D = x.shape
    inner = w_qkv.shape[1] // 3
    dim_head = inner // heads
    scale = dim_head ** -0.5

    qkv = (x.reshape(B * N, D) @ w_qkv).reshape(B, N, 3 * inner)
    q, k, v = jnp.split(qkv, 3, axis=-1)

    def to_heads(t):
        return (t.reshape(B, N, heads, dim_head)
                 .transpose(0, 2, 1, 3)
                 .reshape(B * heads, N, dim_head))

    q, k, v = map(to_heads, (q, k, v))
    W = N // window_size
    BH = B * heads

    bq = q.reshape(BH, W, window_size, dim_head) * scale
    bk = _look_around(k.reshape(BH, W, window_size, dim_head), -1.0)
    bv = _look_around(v.reshape(BH, W, window_size, dim_head), -1.0)
    mask = _build_window_mask(N, window_size)

    sim = jnp.einsum("bwid,bwjd->bwij", bq, bk)
    sim = jnp.where(mask[None], -jnp.finfo(jnp.float32).max, sim)
    attn = jax.nn.softmax(sim, axis=-1)
    out = jnp.einsum("bwij,bwjd->bwid", attn, bv)
    out = (out.reshape(B, heads, N, dim_head)
              .transpose(0, 2, 1, 3)
              .reshape(B, N, inner))
    return (out.reshape(B * N, inner) @ w_out).reshape(B, N, D)


# --------------------------------- main ------------------------------------ #

if __name__ == "__main__":
    # Small but TPU-friendly demo: inner = heads*dim_head = 128 (one lane width),
    # window_size = 8 (one sublane group), chunk_windows=2 so the grid exercises
    # multiple window chunks plus the left/right halo + boundary-mask paths.
    dim = 64
    heads = 4
    dim_head = 32
    inner_dim = heads * dim_head      # 128
    window_size = 8
    B, N = 2, 64

    key = jax.random.PRNGKey(0)
    kx, kqkv, kout = jax.random.split(key, 3)

    x = jax.random.normal(kx, (B, N, dim), dtype=jnp.float32)
    # Deterministic synthetic weights (Linear(dim, inner*3) / Linear(inner, dim), no bias).
    w_qkv = jax.random.normal(kqkv, (dim, inner_dim * 3), dtype=jnp.float32) / jnp.sqrt(dim)
    w_out = jax.random.normal(kout, (inner_dim, dim), dtype=jnp.float32) / jnp.sqrt(inner_dim)

    # One-time weight prep: fold the q scale into the QKV weight.
    w_qkv_folded = fold_q_scale(w_qkv, heads)

    out = local_mha_forward(
        x, w_qkv_folded, w_out, heads=heads, window_size=window_size,
        chunk_windows=2)
    out = jax.block_until_ready(out)

    ref = jax.block_until_ready(
        ref_forward(x, w_qkv, w_out, heads=heads, window_size=window_size))
    max_err = float(jnp.max(jnp.abs(out - ref)))
    assert out.shape == (B, N, dim)
    assert max_err < 5e-2, f"mismatch vs reference: {max_err}"

    print("KERNEL_OK")
</pallas_src>

<mosaic_0001>
module attributes {stable_mosaic.version = 11 : i64} {
  func.func @_matmul_kernel(%arg0: i32, %arg1: i32, %arg2: i32, %arg3: memref<128x64xf32, #tpu.memory_space<vmem>>, %arg4: memref<64x128xf32, #tpu.memory_space<vmem>>, %arg5: memref<128x128xf32, #tpu.memory_space<vmem>>, %arg6: memref<128x128xf32, #tpu.memory_space<vmem>>) attributes {dimension_semantics = [#tpu.dimension_semantics<parallel>, #tpu.dimension_semantics<parallel>, #tpu.dimension_semantics<arbitrary>], iteration_bounds = array<i64: 1, 3, 1>, scalar_prefetch = 0 : i64, scratch_operands = 1 : i64, tpu.core_type = #tpu.core_type<tc>, window_params = [{transform_indices = @transform_0, window_bounds = array<i64: 128, 64>}, {transform_indices = @transform_1, window_bounds = array<i64: 64, 128>}, {transform_indices = @transform_2, window_bounds = array<i64: 128, 128>}]} {
    %c0_i32 = arith.constant 0 : i32
    %0 = arith.cmpi eq, %arg2, %c0_i32 : i32
    %1 = arith.extui %0 : i1 to i32
    %c0_i32_0 = arith.constant 0 : i32
    %2 = arith.cmpi ne, %1, %c0_i32_0 : i32
    scf.if %2 {
      %cst_10 = arith.constant 0.000000e+00 : f32
      %12 = vector.broadcast %cst_10 : f32 to vector<128x128xf32>
      %c0_11 = arith.constant 0 : index
      %c0_12 = arith.constant 0 : index
      %13 = vector.load %arg6[%c0_11, %c0_12] : memref<128x128xf32, #tpu.memory_space<vmem>>, vector<128x128xf32>
      tpu.vector_store %arg6[%c0_11, %c0_12], %12 {strides = array<i32>} : memref<128x128xf32, #tpu.memory_space<vmem>>, vector<128x128xf32>,
    } else {
    }
    %c0 = arith.constant 0 : index
    %c0_1 = arith.constant 0 : index
    %3 = vector.load %arg6[%c0, %c0_1] : memref<128x128xf32, #tpu.memory_space<vmem>>, vector<128x128xf32>
    %c0_2 = arith.constant 0 : index
    %c0_3 = arith.constant 0 : index
    %4 = vector.load %arg3[%c0_2, %c0_3] : memref<128x64xf32, #tpu.memory_space<vmem>>, vector<128x64xf32>
    %c0_4 = arith.constant 0 : index
    %c0_5 = arith.constant 0 : index
    %5 = vector.load %arg4[%c0_4, %c0_5] : memref<64x128xf32, #tpu.memory_space<vmem>>, vector<64x128xf32>
    %cst = arith.constant dense<0.000000e+00> : vector<128x128xf32>
    %6 = tpu.matmul %4, %5, %cst {dimension_numbers = #tpu.dot_dimension_numbers<[1], [0], [0], [1], [0, 0, 1, 1], [], []>} : vector<128x64xf32>, vector<64x128xf32>, vector<128x128xf32> -> vector<128x128xf32>
    %7 = arith.addf %3, %6 : vector<128x128xf32>
    %c0_6 = arith.constant 0 : index
    %c0_7 = arith.constant 0 : index
    %8 = vector.load %arg6[%c0_6, %c0_7] : memref<128x128xf32, #tpu.memory_space<vmem>>, vector<128x128xf32>
    tpu.vector_store %arg6[%c0_6, %c0_7], %7 {strides = array<i32>} : memref<128x128xf32, #tpu.memory_space<vmem>>, vector<128x128xf32>,
    %c0_i32_8 = arith.constant 0 : i32
    %9 = arith.cmpi eq, %arg2, %c0_i32_8 : i32
    %10 = arith.extui %9 : i1 to i32
    %c0_i32_9 = arith.constant 0 : i32
    %11 = arith.cmpi ne, %10, %c0_i32_9 : i32
    scf.if %11 {
      %c0_10 = arith.constant 0 : index
      %c0_11 = arith.constant 0 : index
      %12 = vector.load %arg6[%c0_10, %c0_11] : memref<128x128xf32, #tpu.memory_space<vmem>>, vector<128x128xf32>
      %c0_12 = arith.constant 0 : index
      %c0_13 = arith.constant 0 : index
      %13 = vector.load %arg5[%c0_12, %c0_13] : memref<128x128xf32, #tpu.memory_space<vmem>>, vector<128x128xf32>
      tpu.vector_store %arg5[%c0_12, %c0_13], %12 {strides = array<i32>} : memref<128x128xf32, #tpu.memory_space<vmem>>, vector<128x128xf32>,
    } else {
    }
    return
  }
  func.func @transform_0(%arg0: i32, %arg1: i32, %arg2: i32) -> (i32, i32) {
    %c0_i32 = arith.constant 0 : i32
    return %arg0, %arg2 : i32, i32
  }
  func.func @transform_1(%arg0: i32, %arg1: i32, %arg2: i32) -> (i32, i32) {
    %c0_i32 = arith.constant 0 : i32
    return %arg2, %arg1 : i32, i32
  }
  func.func @transform_2(%arg0: i32, %arg1: i32, %arg2: i32) -> (i32, i32) {
    %c0_i32 = arith.constant 0 : i32
    return %arg0, %arg1 : i32, i32
  }
}

</mosaic_0001>

<llo_original>
// kernel: tpu_custom_call.1
$region0: #{tpu_custom_call.1}
  #allocation0 [shape = 'u32[]', space=smem, size = 0x4, offset = 0x4, fixed_abs, tag = 'smem constant byte address 0x4 - core index']
  #allocation1 [shape = 'u32[144,128]{1,0:T(1,128)}', space=vmem, size = 0x12000, scoped, tag = 'internal scratch']
  #allocation2 [shape = 'f32[128,128]{1,0:T(8,128)}', space=vmem, size = 0x10000, scoped, tag = 'scratch operand']
  %s0 = inlined_call_operand.vmem [shape: f32[128,64], index: 0, kind: input, shape index: {}]
  %s1 = inlined_call_operand.vmem [shape: f32[64,384], index: 1, kind: input, shape index: {}]
  %s2 = inlined_call_operand.hbm [shape: f32[128,384], index: 2, kind: output, shape index: {}]
  %s3 = sld [smem:[#allocation0]]
  $region87: #{tpu_custom_call.1} parent=0
    _
  %s5 = ssub.s32 1, %s3
  %s6 = scalar_select 0, %s5, %s3
  $region1: #{tpu_custom_call.1} parent=0
    #allocation3 [shape = 'u8[65536]{0}', space=vmem, size = 0x10000, scoped, tag = 'input window, operand 1']
    #allocation4 [shape = 'u8[131072]{0}', space=vmem, size = 0x20000, scoped, tag = 'output window, operand 0']
    #allocation5 [shape = 's32[2]{0}', space=sflag, size = 0x8, scoped, tag = 'scoped memory for tpu_custom_call.1']
    %7 = vsyncpa [#allocation5], 0
    %s8 = scalar_lea.sflag [#allocation5], 1
    %9 = vsyncpa %s8, 0
    loop: start=0, step=1, limit=5
    $region2: #{tpu_custom_call.1} parent=1 // loop_pre_header
      _
    $region3: #{tpu_custom_call.1} parent=1 // loop_header
      %s11 = sphi 0, %s15
      %p12 = scmp.ge.s32.totalorder %s11, 5
      %s18 = sphi 0, %s37
      %s19 = sphi 0, %s33
      %s20 = sphi 0, %s29
      %s21 = sphi 0, %s18
      %s22 = sphi 0, %s19
      %s23 = sphi 0, %s20
      %s24 = sphi 0, %s21
      %s25 = sphi 0, %s22
      %s26 = sphi 0, %s23
      %s42 = sphi 0, %s44
      %s45 = sphi 0, %s42
      %s46 = sphi 0, %s45
      %s62 = sphi 0, %s46
      %s70 = sphi 0, %s72
      %s73 = sphi 0, %s70
      %s74 = sphi 0, %s73
      %s90 = sphi 0, %s74
      %s98 = sphi 0, %s100
      %s101 = sphi 0, %s98
      %s102 = sphi 0, %s101
      %s118 = sphi 0, %s102
    $region4: #{tpu_custom_call.1} parent=1 // loop_header_branch
      %14 = sbr.rel (%p12) target = $region8
    $region5: #{tpu_custom_call.1} parent=1 // loop_body
      %s16 = ssub.s32 %s11, 1
      %s17 = ssub.s32 %s11, 2
      %s27 = sadd.s32 1, %s20
      %p28 = scmp.ge.s32.totalorder %s27, 1
      %s29 = scalar_select %p28, 0, %s27
      %s30 = sadd.s32 1, %s19
      %s31 = scalar_select %p28, %s30, %s19
      %p32 = scmp.ge.s32.totalorder %s31, 3
      %s33 = scalar_select %p32, 0, %s31
      %s34 = sadd.s32 1, %s18
      %s35 = scalar_select %p32, %s34, %s18
      %p36 = scmp.ge.s32.totalorder %s35, 1
      %s37 = scalar_select %p36, 0, %s35
      %s38 = ssub.s32 %s18, %s37
      %s39 = ssub.s32 %s20, %s29
      %s40 = sor.u32 %s38, %s39
      %p41 = scmp.eq.s32.totalorder %s40, 0
      %s43 = sadd.s32 %s42, 1
      %s44 = scalar_select %p41, %s42, %s43
      %p47 = pneg %p41
      %p48 = scmp.eq.s32.totalorder %s11, 2
      %p49 = por %p47, %p48
      %p50 = scmp.ne.s32.totalorder %s42, %s45
      %p51 = scmp.eq.s32.totalorder %s11, 0
      %p52 = por %p50, %p51
      %p53 = scmp.ne.s32.totalorder %s42, %s45
      %p54 = scmp.eq.s32.totalorder %s16, 2
      %p55 = por %p53, %p54
      %p56 = scmp.ne.s32.totalorder %s45, %s46
      %p57 = scmp.eq.s32.totalorder %s16, 0
      %p58 = por %p56, %p57
      %p59 = scmp.ne.s32.totalorder %s45, %s46
      %p60 = scmp.eq.s32.totalorder %s17, 2
      %p61 = por %p59, %p60
      %p63 = scmp.ne.s32.totalorder %s46, %s62
      %p64 = scmp.eq.s32.totalorder %s17, 0
      %p65 = por %p63, %p64
      %s66 = ssub.s32 %s20, %s29
      %s67 = ssub.s32 %s19, %s33
      %s68 = sor.u32 %s66, %s67
      %p69 = scmp.eq.s32.totalorder %s68, 0
      %s71 = sadd.s32 %s70, 1
      %s72 = scalar_select %p69, %s70, %s71
      %p75 = pneg %p69
      %p76 = scmp.eq.s32.totalorder %s11, 2
      %p77 = por %p75, %p76
      %p78 = scmp.ne.s32.totalorder %s70, %s73
      %p79 = scmp.eq.s32.totalorder %s11, 0
      %p80 = por %p78, %p79
      %p81 = scmp.ne.s32.totalorder %s70, %s73
      %p82 = scmp.eq.s32.totalorder %s16, 2
      %p83 = por %p81, %p82
      %p84 = scmp.ne.s32.totalorder %s73, %s74
      %p85 = scmp.eq.s32.totalorder %s16, 0
      %p86 = por %p84, %p85
      %p87 = scmp.ne.s32.totalorder %s73, %s74
      %p88 = scmp.eq.s32.totalorder %s17, 2
      %p89 = por %p87, %p88
      %p91 = scmp.ne.s32.totalorder %s74, %s90
      %p92 = scmp.eq.s32.totalorder %s17, 0
      %p93 = por %p91, %p92
      %s94 = ssub.s32 %s18, %s37
      %s95 = ssub.s32 %s19, %s33
      %s96 = sor.u32 %s94, %s95
      %p97 = scmp.eq.s32.totalorder %s96, 0
      %s99 = sadd.s32 %s98, 1
      %s100 = scalar_select %p97, %s98, %s99
      %p103 = pneg %p97
      %p104 = scmp.eq.s32.totalorder %s11, 2
      %p105 = por %p103, %p104
      %p106 = scmp.ne.s32.totalorder %s98, %s101
      %p107 = scmp.eq.s32.totalorder %s11, 0
      %p108 = por %p106, %p107
      %p109 = scmp.ne.s32.totalorder %s98, %s101
      %p110 = scmp.eq.s32.totalorder %s16, 2
      %p111 = por %p109, %p110
      %p112 = scmp.ne.s32.totalorder %s101, %s102
      %p113 = scmp.eq.s32.totalorder %s16, 0
      %p114 = por %p112, %p113
      %p115 = scmp.ne.s32.totalorder %s101, %s102
      %p116 = scmp.eq.s32.totalorder %s17, 2
      %p117 = por %p115, %p116
      %p119 = scmp.ne.s32.totalorder %s102, %s118
      %p120 = scmp.eq.s32.totalorder %s17, 0
      %p121 = por %p119, %p120
      %p122 = scmp.le.s32.totalorder 1, %s11
      %p123 = scmp.lt.s32.totalorder %s11, 4
      %p124 = pnand %p122, %p123
      %p125 = pneg %p124
      // Predicated region
      $region9: #{tpu_custom_call.1} parent=5 // pred_check
        _
      $region10: #{tpu_custom_call.1} parent=5 // pred_check_branch
        %127 = sbr.rel (%p124) target = $region12
      $region11: #{tpu_custom_call.1} parent=5 // pred_region
        %s128 = ssub.s32 %s11, 1
        // Predicated region
        $region13: #{tpu_custom_call.1} parent=11 // pred_check
          %p129 = pneg %p58
        $region14: #{tpu_custom_call.1} parent=11 // pred_check_branch
          %131 = sbr.rel (%p129) target = $region16
        $region15: #{tpu_custom_call.1} parent=11 // pred_region
          %s132 = smul.u32 16, %s21
          %p133 = scmp.lt.s32.totalorder %s132, 15
          %s134 = scalar_select %p133, %s132, 15
          %p135 = scmp.lt.s32.totalorder %s23, 0
          %s136 = scalar_select %p135, %s23, 0
          %s137 = sadd.s32 %s136, %s134
          %s138 = smul.addr %s137, 8
          %s139 = scalar_lea.vmem %s0, %s138
          %s140 = smul.u32 16, %s21
        $region16: #{tpu_custom_call.1} parent=11 // pred_fallthru
          _
      $region12: #{tpu_custom_call.1} parent=5 // pred_fallthru
        _
      %p141 = scmp.lt.s32.totalorder %s11, 3
      // Predicated region
      $region17: #{tpu_custom_call.1} parent=5 // pred_check
        %p142 = pneg %p141
      $region18: #{tpu_custom_call.1} parent=5 // pred_check_branch
        %144 = sbr.rel (%p142) target = $region20
      $region19: #{tpu_custom_call.1} parent=5 // pred_region
        // Predicated region
        $region21: #{tpu_custom_call.1} parent=19 // pred_check
          %p145 = pneg %p80
        $region22: #{tpu_custom_call.1} parent=19 // pred_check_branch
          %147 = sbr.rel (%p145) target = $region24
        $region23: #{tpu_custom_call.1} parent=19 // pred_region
          %s148 = sand.u32 %s70, 1
          %s149 = sand.u32 %s70, 1
          %s150 = smul.addr %s149, 64
          %s151 = scalar_lea.vmem [#allocation3], %s150
          %s152 = smul.u32 8, %s20
          %s153 = smul.addr %s152, 3
          %s154 = sadd.s32 %s19, %s153
          %s155 = smul.addr %s154, 8
          %s156 = scalar_lea.vmem %s1, %s155
          // Predicated region
          $region25: #{tpu_custom_call.1} parent=23 // pred_check
            _
          $region26: #{tpu_custom_call.1} parent=23 // pred_check_branch
            %158 = sbr.rel (0) target = $region28
          $region27: #{tpu_custom_call.1} parent=23 // pred_region
            // Predicated region
            $region29: #{tpu_custom_call.1} parent=27 // pred_check
              _
            $region30: #{tpu_custom_call.1} parent=27 // pred_check_branch
              %160 = sbr.rel (0) target = $region32
            $region31: #{tpu_custom_call.1} parent=27 // pred_region
              // Predicated region
              $region44: #{tpu_custom_call.1} parent=31 // pred_check
                _
              $region45: #{tpu_custom_call.1} parent=31 // pred_check_branch
                %189 = sbr.rel (0) target = $region47
              $region46: #{tpu_custom_call.1} parent=31 // pred_region
                loop: start=0, step=1, limit=1
                $region48: #{tpu_custom_call.1} parent=46 // loop_pre_header
                  _
                $region49: #{tpu_custom_call.1} parent=46 // loop_header
                  %s191 = sphi 0, %s195
                  %p192 = scmp.ge.s32.totalorder %s191, 1
                  %s196 = sphi %s156, %s156
                  %s197 = sphi %s151, %s151
                $region50: #{tpu_custom_call.1} parent=46 // loop_header_branch
                  %194 = sbr.rel (%p192) target = $region54
                $region51: #{tpu_custom_call.1} parent=46 // loop_body
                  %v198 = vld [vmem:[%s196] sm:$0xff]
                  %199 = vst [vmem:[%s197] sm:$0xff] %v198
                  %v200 = vld [vmem:[%s196 + $0x18] sm:$0xff]
                  %201 = vst [vmem:[%s197 + $0x8] sm:$0xff] %v200
                  %v202 = vld [vmem:[%s196 + $0x30] sm:$0xff]
                  %203 = vst [vmem:[%s197 + $0x10] sm:$0xff] %v202
                  %v204 = vld [vmem:[%s196 + $0x48] sm:$0xff]
                  %205 = vst [vmem:[%s197 + $0x18] sm:$0xff] %v204
                  %v206 = vld [vmem:[%s196 + $0x60] sm:$0xff]
                  %207 = vst [vmem:[%s197 + $0x20] sm:$0xff] %v206
                  %v208 = vld [vmem:[%s196 + $0x78] sm:$0xff]
                  %209 = vst [vmem:[%s197 + $0x28] sm:$0xff] %v208
                  %v210 = vld [vmem:[%s196 + $0x90] sm:$0xff]
                  %211 = vst [vmem:[%s197 + $0x30] sm:$0xff] %v210
                  %v212 = vld [vmem:[%s196 + $0xa8] sm:$0xff]
                  %213 = vst [vmem:[%s197 + $0x38] sm:$0xff] %v212
                $region52: #{tpu_custom_call.1} parent=46 // loop_footer
                  %s195 = sadd.s32 1, %s191
                $region53: #{tpu_custom_call.1} parent=46 // loop_footer_branch
                  %190 = sbr.rel target = $region49
                $region54: #{tpu_custom_call.1} parent=46 // loop_exit
                  _
              $region47: #{tpu_custom_call.1} parent=31 // pred_fallthru
                _
              // Predicated region
              $region55: #{tpu_custom_call.1} parent=31 // pred_check
                _
              $region56: #{tpu_custom_call.1} parent=31 // pred_check_branch
                %215 = sbr.rel target = $region58
              $region57: #{tpu_custom_call.1} parent=31 // pred_region
                _
              $region58: #{tpu_custom_call.1} parent=31 // pred_fallthru
                _
            $region32: #{tpu_custom_call.1} parent=27 // pred_fallthru
              _
            // Predicated region
            $region33: #{tpu_custom_call.1} parent=27 // pred_check
              _
            $region34: #{tpu_custom_call.1} parent=27 // pred_check_branch
              %162 = sbr.rel target = $region36
            $region35: #{tpu_custom_call.1} parent=27 // pred_region
              loop: start=0, step=1, limit=1
              $region37: #{tpu_custom_call.1} parent=35 // loop_pre_header
                _
              $region38: #{tpu_custom_call.1} parent=35 // loop_header
                %s165 = sphi 0, %s169
                %p166 = scmp.ge.s32.totalorder %s165, 1
                %s170 = sphi %s156, %s156
                %s171 = sphi %s151, %s151
              $region39: #{tpu_custom_call.1} parent=35 // loop_header_branch
                %168 = sbr.rel (%p166) target = $region43
              $region40: #{tpu_custom_call.1} parent=35 // loop_body
                %v172 = vld [vmem:[%s170] sm:$0xff]
                %173 = vst [vmem:[%s171] sm:$0xff] %v172
                %v174 = vld [vmem:[%s170 + $0x18] sm:$0xff]
                %175 = vst [vmem:[%s171 + $0x8] sm:$0xff] %v174
                %v176 = vld [vmem:[%s170 + $0x30] sm:$0xff]
                %177 = vst [vmem:[%s171 + $0x10] sm:$0xff] %v176
                %v178 = vld [vmem:[%s170 + $0x48] sm:$0xff]
                %179 = vst [vmem:[%s171 + $0x18] sm:$0xff] %v178
                %v180 = vld [vmem:[%s170 + $0x60] sm:$0xff]
                %181 = vst [vmem:[%s171 + $0x20] sm:$0xff] %v180
                %v182 = vld [vmem:[%s170 + $0x78] sm:$0xff]
                %183 = vst [vmem:[%s171 + $0x28] sm:$0xff] %v182
                %v184 = vld [vmem:[%s170 + $0x90] sm:$0xff]
                %185 = vst [vmem:[%s171 + $0x30] sm:$0xff] %v184
                %v186 = vld [vmem:[%s170 + $0xa8] sm:$0xff]
                %187 = vst [vmem:[%s171 + $0x38] sm:$0xff] %v186
              $region41: #{tpu_custom_call.1} parent=35 // loop_footer
                %s169 = sadd.s32 1, %s165
              $region42: #{tpu_custom_call.1} parent=35 // loop_footer_branch
                %164 = sbr.rel target = $region38
              $region43: #{tpu_custom_call.1} parent=35 // loop_exit
                _
            $region36: #{tpu_custom_call.1} parent=27 // pred_fallthru
              _
          $region28: #{tpu_custom_call.1} parent=23 // pred_fallthru
            _
          %216 = vnop
        $region24: #{tpu_custom_call.1} parent=19 // pred_fallthru
          _
      $region20: #{tpu_custom_call.1} parent=5 // pred_fallthru
        _
      %p217 = scmp.le.s32.totalorder 1, %s11
      %p218 = scmp.lt.s32.totalorder %s11, 4
      %p219 = pnand %p217, %p218
      %p220 = pneg %p219
      // Predicated region
      $region59: #{tpu_custom_call.1} parent=5 // pred_check
        _
      $region60: #{tpu_custom_call.1} parent=5 // pred_check_branch
        %222 = sbr.rel (%p219) target = $region62
      $region61: #{tpu_custom_call.1} parent=5 // pred_region
        %s223 = ssub.s32 %s11, 1
        %s224 = sand.u32 %s73, 1
        %s225 = sand.u32 %s73, 1
        %s226 = smul.addr %s225, 64
        %s227 = scalar_lea.vmem [#allocation3], %s226
        // Predicated region
        $region63: #{tpu_custom_call.1} parent=61 // pred_check
          %p228 = pneg %p86
        $region64: #{tpu_custom_call.1} parent=61 // pred_check_branch
          %230 = sbr.rel (%p228) target = $region66
        $region65: #{tpu_custom_call.1} parent=61 // pred_region
          _
        $region66: #{tpu_custom_call.1} parent=61 // pred_fallthru
          _
        %s231 = smul.u32 16, %s21
        %p232 = scmp.lt.s32.totalorder %s231, 15
        %s233 = scalar_select %p232, %s231, 15
        %p234 = scmp.lt.s32.totalorder %s23, 0
        %s235 = scalar_select %p234, %s23, 0
        %s236 = sadd.s32 %s235, %s233
        %s237 = smul.addr %s236, 8
        %s238 = scalar_lea.vmem %s0, %s237
        %p239 = pneg %p58
        %p240 = pneg %p55
        %s241 = sand.u32 %s73, 1
        %s242 = sand.u32 %s73, 1
        %s243 = smul.addr %s242, 64
        %s244 = scalar_lea.vmem [#allocation3], %s243
        %p245 = pneg %p86
        %p246 = pneg %p83
        %p247 = pneg %p114
        %p248 = pneg %p111
        %s249 = sand.u32 %s101, 1
        %s250 = scalar_lea.sflag [#allocation5], %s249
        %s251 = sand.u32 %s101, 1
        %s252 = smul.addr %s251, 128
        %s253 = scalar_lea.vmem [#allocation4], %s252
        %s254 = smul.u32 16, %s21
        %p255 = scmp.lt.s32.totalorder %s254, 15
        %s256 = scalar_select %p255, %s254, 15
        %p257 = scmp.lt.s32.totalorder %s23, 0
        %s258 = scalar_select %p257, %s23, 0
        %s259 = sadd.s32 %s258, %s256
        %s260 = smul.addr %s259, 8
        %s261 = scalar_lea.vmem %s0, %s260
        %s262 = smul.u32 16, %s21
        %s263 = smul.u32 8, %s23
        %s264 = smul.u32 16, %s21
        %p265 = scmp.eq.s32.totalorder %s23, 0
        // Predicated region
        $region67: #{tpu_custom_call.1} parent=61 // pred_check
          %p266 = pneg %p265
        $region68: #{tpu_custom_call.1} parent=61 // pred_check_branch
          %268 = sbr.rel (%p266) target = $region70
        $region69: #{tpu_custom_call.1} parent=61 // pred_region
          %269 = vst [vmem:[#allocation2] sm:$0xff] 0.0
          %270 = vst [vmem:[#allocation2 + $0x8] sm:$0xff] 0.0
          %271 = vst [vmem:[#allocation2 + $0x10] sm:$0xff] 0.0
          %272 = vst [vmem:[#allocation2 + $0x18] sm:$0xff] 0.0
          %273 = vst [vmem:[#allocation2 + $0x20] sm:$0xff] 0.0
          %274 = vst [vmem:[#allocation2 + $0x28] sm:$0xff] 0.0
          %275 = vst [vmem:[#allocation2 + $0x30] sm:$0xff] 0.0
          %276 = vst [vmem:[#allocation2 + $0x38] sm:$0xff] 0.0
          %277 = vst [vmem:[#allocation2 + $0x40] sm:$0xff] 0.0
          %278 = vst [vmem:[#allocation2 + $0x48] sm:$0xff] 0.0
          %279 = vst [vmem:[#allocation2 + $0x50] sm:$0xff] 0.0
          %280 = vst [vmem:[#allocation2 + $0x58] sm:$0xff] 0.0
          %281 = vst [vmem:[#allocation2 + $0x60] sm:$0xff] 0.0
          %282 = vst [vmem:[#allocation2 + $0x68] sm:$0xff] 0.0
          %283 = vst [vmem:[#allocation2 + $0x70] sm:$0xff] 0.0
          %284 = vst [vmem:[#allocation2 + $0x78] sm:$0xff] 0.0
        $region70: #{tpu_custom_call.1} parent=61 // pred_fallthru
          _
        %v285 = vld [vmem:[#allocation2] sm:$0xff]
        %v286 = vld [vmem:[#allocation2 + $0x8] sm:$0xff]
        %v287 = vld [vmem:[#allocation2 + $0x10] sm:$0xff]
        %v288 = vld [vmem:[#allocation2 + $0x18] sm:$0xff]
        %v289 = vld [vmem:[#allocation2 + $0x20] sm:$0xff]
        %v290 = vld [vmem:[#allocation2 + $0x28] sm:$0xff]
        %v291 = vld [vmem:[#allocation2 + $0x30] sm:$0xff]
        %v292 = vld [vmem:[#allocation2 + $0x38] sm:$0xff]
        %v293 = vld [vmem:[#allocation2 + $0x40] sm:$0xff]
        %v294 = vld [vmem:[#allocation2 + $0x48] sm:$0xff]
        %v295 = vld [vmem:[#allocation2 + $0x50] sm:$0xff]
        %v296 = vld [vmem:[#allocation2 + $0x58] sm:$0xff]
        %v297 = vld [vmem:[#allocation2 + $0x60] sm:$0xff]
        %v298 = vld [vmem:[#allocation2 + $0x68] sm:$0xff]
        %v299 = vld [vmem:[#allocation2 + $0x70] sm:$0xff]
        %v300 = vld [vmem:[#allocation2 + $0x78] sm:$0xff]
        %v301 = vld [vmem:[%s261] sm:$0xff]
        %v302 = vld [vmem:[%s261 + $0x8] sm:$0xff]
        %v303 = vld [vmem:[%s261 + $0x10] sm:$0xff]
        %v304 = vld [vmem:[%s261 + $0x18] sm:$0xff]
        %v305 = vld [vmem:[%s261 + $0x20] sm:$0xff]
        %v306 = vld [vmem:[%s261 + $0x28] sm:$0xff]
        %v307 = vld [vmem:[%s261 + $0x30] sm:$0xff]
        %v308 = vld [vmem:[%s261 + $0x38] sm:$0xff]
        %v309 = vld [vmem:[%s261 + $0x40] sm:$0xff]
        %v310 = vld [vmem:[%s261 + $0x48] sm:$0xff]
        %v311 = vld [vmem:[%s261 + $0x50] sm:$0xff]
        %v312 = vld [vmem:[%s261 + $0x58] sm:$0xff]
        %v313 = vld [vmem:[%s261 + $0x60] sm:$0xff]
        %v314 = vld [vmem:[%s261 + $0x68] sm:$0xff]
        %v315 = vld [vmem:[%s261 + $0x70] sm:$0xff]
        %v316 = vld [vmem:[%s261 + $0x78] sm:$0xff]
        %v317 = vld [vmem:[%s227] sm:$0xff]
        %v318 = vld [vmem:[%s227 + $0x8] sm:$0xff]
        %v319 = vld [vmem:[%s227 + $0x10] sm:$0xff]
        %v320 = vld [vmem:[%s227 + $0x18] sm:$0xff]
        %v321 = vld [vmem:[%s227 + $0x20] sm:$0xff]
        %v322 = vld [vmem:[%s227 + $0x28] sm:$0xff]
        %v323 = vld [vmem:[%s227 + $0x30] sm:$0xff]
        %v324 = vld [vmem:[%s227 + $0x38] sm:$0xff]
        %vm325 = vcmask 523264
        %v327 = vsel %vm325, %v301, 0
        %v330 = vsel %vm325, %v302, 0
        %v333 = vsel %vm325, %v303, 0
        %v336 = vsel %vm325, %v304, 0
        %v339 = vsel %vm325, %v305, 0
        %v342 = vsel %vm325, %v306, 0
        %v345 = vsel %vm325, %v307, 0
        %v348 = vsel %vm325, %v308, 0
        %v351 = vsel %vm325, %v309, 0
        %v354 = vsel %vm325, %v310, 0
        %v357 = vsel %vm325, %v311, 0
        %v360 = vsel %vm325, %v312, 0
        %v363 = vsel %vm325, %v313, 0
        %v366 = vsel %vm325, %v314, 0
        %v369 = vsel %vm325, %v315, 0
        %v372 = vsel %vm325, %v316, 0
        %374 = vmatprep.subr.mxu0 0.0
        %375 = vmatpush1.msra.mxu0 %v317
        %376 = vmatprep.subr.mxu0 0.0
        %377 = vmatpush1.msra.mxu0 %v318
        %378 = vmatprep.subr.mxu0 0.0
        %379 = vmatpush1.msra.mxu0 %v319
        %380 = vmatprep.subr.mxu0 0.0
        %381 = vmatpush1.msra.mxu0 %v320
        %382 = vmatprep.subr.mxu0 0.0
        %383 = vmatpush1.msra.mxu0 %v321
        %384 = vmatprep.subr.mxu0 0.0
        %385 = vmatpush1.msra.mxu0 %v322
        %386 = vmatprep.subr.mxu0 0.0
        %387 = vmatpush1.msra.mxu0 %v323
        %388 = vmatprep.subr.mxu0 0.0
        %389 = vmatpush1.msra.mxu0 %v324
        %390 = vmatprep.subr.mxu0 0.0
        %391 = vmatpush1.msra.mxu0 0.0
        %392 = vmatprep.subr.mxu0 0.0
        %393 = vmatpush1.msra.mxu0 0.0
        %394 = vmatprep.subr.mxu0 0.0
        %395 = vmatpush1.msra.mxu0 0.0
        %396 = vmatprep.subr.mxu0 0.0
        %397 = vmatpush1.msra.mxu0 0.0
        %398 = vmatprep.subr.mxu0 0.0
        %399 = vmatpush1.msra.mxu0 0.0
        %400 = vmatprep.subr.mxu0 0.0
        %401 = vmatpush1.msra.mxu0 0.0
        %402 = vmatprep.subr.mxu0 0.0
        %403 = vmatpush1.msra.mxu0 0.0
        %404 = vmatprep.subr.mxu0 0.0
        %405 = vmatpush1.msra.mxu0 0.0
        %406 = vmatprep.subr.mxu0 0.0
        %407 = vmatpush1.msra.mxu0 0.0
        %408 = vmatprep.subr.mxu0 0.0
        %409 = vmatpush1.msra.mxu0 0.0
        %410 = vmatprep.subr.mxu0 0.0
        %411 = vmatpush1.msra.mxu0 0.0
        %412 = vmatprep.subr.mxu0 0.0
        %413 = vmatpush1.msra.mxu0 0.0
        %414 = vmatprep.subr.mxu0 0.0
        %415 = vmatpush1.msra.mxu0 0.0
        %416 = vmatprep.subr.mxu0 0.0
        %417 = vmatpush1.msra.mxu0 0.0
        %418 = vmatprep.subr.mxu0 0.0
        %419 = vmatpush1.msra.mxu0 0.0
        %420 = vmatprep.subr.mxu0 0.0
        %421 = vmatpush1.msra.mxu0 0.0
        %422 = vmatprep.subr.mxu0 0.0
        %423 = vmatpush1.msra.mxu0 0.0
        %424 = vmatprep.subr.mxu0 0.0
        %425 = vmatpush1.msra.mxu0 0.0
        %426 = vmatprep.subr.mxu0 0.0
        %427 = vmatpush1.msra.mxu0 0.0
        %428 = vmatprep.subr.mxu0 0.0
        %429 = vmatpush1.msra.mxu0 0.0
        %430 = vmatprep.subr.mxu0 0.0
        %431 = vmatpush1.msra.mxu0 0.0
        %432 = vmatprep.subr.mxu0 0.0
        %433 = vmatpush1.msra.mxu0 0.0
        %434 = vmatprep.subr.mxu0 0.0
        %435 = vmatpush1.msra.mxu0 0.0
        %436 = vmatprep.subr.mxu0 0.0
        %437 = vmatpush1.msra.mxu0 0.0
        %438 = vmatprep.mubr.f32.mxu0 0.0
        %439 = vmatmul.mubr.f32.gmra.mrb[0].mxu0 %v327
        %v440 = vpop.f32.mrb[0].mxu0
        %v441 = vadd.f32 0.0, %v440
        %v442 = vpop.f32.mrb[0].mxu0
        %443 = vmatprep.mubr.f32.mxu0 0.0
        %444 = vmatmul.mubr.f32.gmra.mrb[0].mxu0 %v330
        %v445 = vpop.f32.mrb[0].mxu0
        %v446 = vadd.f32 0.0, %v445
        %v447 = vpop.f32.mrb[0].mxu0
        %448 = vmatprep.mubr.f32.mxu0 0.0
        %449 = vmatmul.mubr.f32.gmra.mrb[0].mxu0 %v333
        %v450 = vpop.f32.mrb[0].mxu0
        %v451 = vadd.f32 0.0, %v450
        %v452 = vpop.f32.mrb[0].mxu0
        %453 = vmatprep.mubr.f32.mxu0 0.0
        %454 = vmatmul.mubr.f32.gmra.mrb[0].mxu0 %v336
        %v455 = vpop.f32.mrb[0].mxu0
        %v456 = vadd.f32 0.0, %v455
        %v457 = vpop.f32.mrb[0].mxu0
        %458 = vmatprep.mubr.f32.mxu0 0.0
        %459 = vmatmul.mubr.f32.gmra.mrb[0].mxu0 %v339
        %v460 = vpop.f32.mrb[0].mxu0
        %v461 = vadd.f32 0.0, %v460
        %v462 = vpop.f32.mrb[0].mxu0
        %463 = vmatprep.mubr.f32.mxu0 0.0
        %464 = vmatmul.mubr.f32.gmra.mrb[0].mxu0 %v342
        %v465 = vpop.f32.mrb[0].mxu0
        %v466 = vadd.f32 0.0, %v465
        %v467 = vpop.f32.mrb[0].mxu0
        %468 = vmatprep.mubr.f32.mxu0 0.0
        %469 = vmatmul.mubr.f32.gmra.mrb[0].mxu0 %v345
        %v470 = vpop.f32.mrb[0].mxu0
        %v471 = vadd.f32 0.0, %v470
        %v472 = vpop.f32.mrb[0].mxu0
        %473 = vmatprep.mubr.f32.mxu0 0.0
        %474 = vmatmul.mubr.f32.gmra.mrb[0].mxu0 %v348
        %v475 = vpop.f32.mrb[0].mxu0
        %v476 = vadd.f32 0.0, %v475
        %v477 = vpop.f32.mrb[0].mxu0
        %478 = vmatprep.mubr.f32.mxu0 0.0
        %479 = vmatmul.mubr.f32.gmra.mrb[0].mxu0 %v351
        %v480 = vpop.f32.mrb[0].mxu0
        %v481 = vadd.f32 0.0, %v480
        %v482 = vpop.f32.mrb[0].mxu0
        %483 = vmatprep.mubr.f32.mxu0 0.0
        %484 = vmatmul.mubr.f32.gmra.mrb[0].mxu0 %v354
        %v485 = vpop.f32.mrb[0].mxu0
        %v486 = vadd.f32 0.0, %v485
        %v487 = vpop.f32.mrb[0].mxu0
        %488 = vmatprep.mubr.f32.mxu0 0.0
        %489 = vmatmul.mubr.f32.gmra.mrb[0].mxu0 %v357
        %v490 = vpop.f32.mrb[0].mxu0
        %v491 = vadd.f32 0.0, %v490
        %v492 = vpop.f32.mrb[0].mxu0
        %493 = vmatprep.mubr.f32.mxu0 0.0
        %494 = vmatmul.mubr.f32.gmra.mrb[0].mxu0 %v360
        %v495 = vpop.f32.mrb[0].mxu0
        %v496 = vadd.f32 0.0, %v495
        %v497 = vpop.f32.mrb[0].mxu0
        %498 = vmatprep.mubr.f32.mxu0 0.0
        %499 = vmatmul.mubr.f32.gmra.mrb[0].mxu0 %v363
        %v500 = vpop.f32.mrb[0].mxu0
        %v501 = vadd.f32 0.0, %v500
        %v502 = vpop.f32.mrb[0].mxu0
        %503 = vmatprep.mubr.f32.mxu0 0.0
        %504 = vmatmul.mubr.f32.gmra.mrb[0].mxu0 %v366
        %v505 = vpop.f32.mrb[0].mxu0
        %v506 = vadd.f32 0.0, %v505
        %v507 = vpop.f32.mrb[0].mxu0
        %508 = vmatprep.mubr.f32.mxu0 0.0
        %509 = vmatmul.mubr.f32.gmra.mrb[0].mxu0 %v369
        %v510 = vpop.f32.mrb[0].mxu0
        %v511 = vadd.f32 0.0, %v510
        %v512 = vpop.f32.mrb[0].mxu0
        %513 = vmatprep.mubr.f32.mxu0 0.0
        %514 = vmatmul.mubr.f32.gmra.mrb[0].mxu0 %v372
        %v515 = vpop.f32.mrb[0].mxu0
        %v516 = vadd.f32 0.0, %v515
        %v517 = vpop.f32.mrb[0].mxu0
        %518 = vdwg.mxu0
        %v519 = vadd.f32 %v285, %v441
        %v520 = vadd.f32 %v286, %v446
        %v521 = vadd.f32 %v287, %v451
        %v522 = vadd.f32 %v288, %v456
        %v523 = vadd.f32 %v289, %v461
        %v524 = vadd.f32 %v290, %v466
        %v525 = vadd.f32 %v291, %v471
        %v526 = vadd.f32 %v292, %v476
        %v527 = vadd.f32 %v293, %v481
        %v528 = vadd.f32 %v294, %v486
        %v529 = vadd.f32 %v295, %v491
        %v530 = vadd.f32 %v296, %v496
        %v531 = vadd.f32 %v297, %v501
        %v532 = vadd.f32 %v298, %v506
        %v533 = vadd.f32 %v299, %v511
        %v534 = vadd.f32 %v300, %v516
        %535 = vst [vmem:[#allocation2] sm:$0xff] %v519
        %536 = vst [vmem:[#allocation2 + $0x8] sm:$0xff] %v520
        %537 = vst [vmem:[#allocation2 + $0x10] sm:$0xff] %v521
        %538 = vst [vmem:[#allocation2 + $0x18] sm:$0xff] %v522
        %539 = vst [vmem:[#allocation2 + $0x20] sm:$0xff] %v523
        %540 = vst [vmem:[#allocation2 + $0x28] sm:$0xff] %v524
        %541 = vst [vmem:[#allocation2 + $0x30] sm:$0xff] %v525
        %542 = vst [vmem:[#allocation2 + $0x38] sm:$0xff] %v526
        %543 = vst [vmem:[#allocation2 + $0x40] sm:$0xff] %v527
        %544 = vst [vmem:[#allocation2 + $0x48] sm:$0xff] %v528
        %545 = vst [vmem:[#allocation2 + $0x50] sm:$0xff] %v529
        %546 = vst [vmem:[#allocation2 + $0x58] sm:$0xff] %v530
        %547 = vst [vmem:[#allocation2 + $0x60] sm:$0xff] %v531
        %548 = vst [vmem:[#allocation2 + $0x68] sm:$0xff] %v532
        %549 = vst [vmem:[#allocation2 + $0x70] sm:$0xff] %v533
        %550 = vst [vmem:[#allocation2 + $0x78] sm:$0xff] %v534
        // Predicated region
        $region71: #{tpu_custom_call.1} parent=61 // pred_check
          %p551 = pneg %p265
        $region72: #{tpu_custom_call.1} parent=61 // pred_check_branch
          %553 = sbr.rel (%p551) target = $region74
        $region73: #{tpu_custom_call.1} parent=61 // pred_region
          %v554 = vld [vmem:[#allocation2] sm:$0xff]
          %v555 = vld [vmem:[#allocation2 + $0x8] sm:$0xff]
          %v556 = vld [vmem:[#allocation2 + $0x10] sm:$0xff]
          %v557 = vld [vmem:[#allocation2 + $0x18] sm:$0xff]
          %v558 = vld [vmem:[#allocation2 + $0x20] sm:$0xff]
          %v559 = vld [vmem:[#allocation2 + $0x28] sm:$0xff]
          %v560 = vld [vmem:[#allocation2 + $0x30] sm:$0xff]
          %v561 = vld [vmem:[#allocation2 + $0x38] sm:$0xff]
          %v562 = vld [vmem:[#allocation2 + $0x40] sm:$0xff]
          %v563 = vld [vmem:[#allocation2 + $0x48] sm:$0xff]
          %v564 = vld [vmem:[#allocation2 + $0x50] sm:$0xff]
          %v565 = vld [vmem:[#allocation2 + $0x58] sm:$0xff]
          %v566 = vld [vmem:[#allocation2 + $0x60] sm:$0xff]
          %v567 = vld [vmem:[#allocation2 + $0x68] sm:$0xff]
          %v568 = vld [vmem:[#allocation2 + $0x70] sm:$0xff]
          %v569 = vld [vmem:[#allocation2 + $0x78] sm:$0xff]
          %570 = vst [vmem:[%s253] sm:$0xff] %v554
          %571 = vst [vmem:[%s253 + $0x8] sm:$0xff] %v555
          %572 = vst [vmem:[%s253 + $0x10] sm:$0xff] %v556
          %573 = vst [vmem:[%s253 + $0x18] sm:$0xff] %v557
          %574 = vst [vmem:[%s253 + $0x20] sm:$0xff] %v558
          %575 = vst [vmem:[%s253 + $0x28] sm:$0xff] %v559
          %576 = vst [vmem:[%s253 + $0x30] sm:$0xff] %v560
          %577 = vst [vmem:[%s253 + $0x38] sm:$0xff] %v561
          %578 = vst [vmem:[%s253 + $0x40] sm:$0xff] %v562
          %579 = vst [vmem:[%s253 + $0x48] sm:$0xff] %v563
          %580 = vst [vmem:[%s253 + $0x50] sm:$0xff] %v564
          %581 = vst [vmem:[%s253 + $0x58] sm:$0xff] %v565
          %582 = vst [vmem:[%s253 + $0x60] sm:$0xff] %v566
          %583 = vst [vmem:[%s253 + $0x68] sm:$0xff] %v567
          %584 = vst [vmem:[%s253 + $0x70] sm:$0xff] %v568
          %585 = vst [vmem:[%s253 + $0x78] sm:$0xff] %v569
        $region74: #{tpu_custom_call.1} parent=61 // pred_fallthru
          _
        %s586 = sand.u32 %s101, 1
        %s587 = scalar_lea.sflag [#allocation5], %s586
        %s588 = sand.u32 %s101, 1
        %s589 = smul.addr %s588, 128
        %s590 = scalar_lea.vmem [#allocation4], %s589
        // Predicated region
        $region75: #{tpu_custom_call.1} parent=61 // pred_check
          %p591 = pneg %p111
        $region76: #{tpu_custom_call.1} parent=61 // pred_check_branch
          %593 = sbr.rel (%p591) target = $region78
        $region77: #{tpu_custom_call.1} parent=61 // pred_region
          %s594 = smul.u32 16, %s21
          %s596 = ssub.s32 2048, 2048
          %597 = vsyncadd %s587, %s596
          %s598 = smul.addr %s594, 3
          %s599 = sadd.s32 %s22, %s598
          %s600 = smul.addr %s599, 128
          %s601 = scalar_lea.hbm %s2, %s600
          %s602 = sshll.u32 %s590, 4
          %s603 = int_to_ptr.vmem [resolvable:$true] %s602
          %608 = dma.vmem_to_hbm [thread:$0]  %s603, 2048, %s601, %s587, 128, 384, 8
        $region78: #{tpu_custom_call.1} parent=61 // pred_fallthru
          _
      $region62: #{tpu_custom_call.1} parent=5 // pred_fallthru
        _
      %p609 = scmp.le.s32.totalorder 2, %s11
      // Predicated region
      $region79: #{tpu_custom_call.1} parent=5 // pred_check
        %p610 = pneg %p609
      $region80: #{tpu_custom_call.1} parent=5 // pred_check_branch
        %612 = sbr.rel (%p610) target = $region82
      $region81: #{tpu_custom_call.1} parent=5 // pred_region
        %s613 = ssub.s32 %s11, 2
        // Predicated region
        $region83: #{tpu_custom_call.1} parent=81 // pred_check
          %p614 = pneg %p117
        $region84: #{tpu_custom_call.1} parent=81 // pred_check_branch
          %616 = sbr.rel (%p614) target = $region86
        $region85: #{tpu_custom_call.1} parent=81 // pred_region
          %s617 = sand.u32 %s102, 1
          %s618 = scalar_lea.sflag [#allocation5], %s617
          %s619 = sand.u32 %s102, 1
          %s620 = smul.addr %s619, 128
          %s621 = scalar_lea.vmem [#allocation4], %s620
          %622 = dma.done %s618, 2048
        $region86: #{tpu_custom_call.1} parent=81 // pred_fallthru
          _
      $region82: #{tpu_custom_call.1} parent=5 // pred_fallthru
        _
    $region6: #{tpu_custom_call.1} parent=1 // loop_footer
      %s15 = sadd.s32 1, %s11
    $region7: #{tpu_custom_call.1} parent=1 // loop_footer_branch
      %10 = sbr.rel target = $region3
    $region8: #{tpu_custom_call.1} parent=1 // loop_exit
      _
    %623 = vsyncpa [#allocation5], 1
    %s624 = scalar_lea.sflag [#allocation5], 1
    %625 = vsyncpa %s624, 1

</llo_original>
